<compile_context>
chip_gen: v5e
topology: v5e:2x2
jax: 0.10.0
libtpu: 0.0.40
codegen_flags: <defaults>
</compile_context>

<pallas_src>
import functools

import numpy as np
import jax
import jax.numpy as jnp
from jax import lax
from jax.experimental import pallas as pl
from jax.experimental.pallas import tpu as pltpu

LANE = 128
ANCHOR_TILE = 8          # anchors handled per Kernel-B grid step (static unroll)


def _round_up(x, m):
    return ((x + m - 1) // m) * m


# -----------------------------------------------------------------------------
# Kernel A: pairwise squared distances  D2[i,j] = ||e_i||^2 + ||e_j||^2 - 2<e_i,e_j>
#   * Gram matrix on the MXU, K-tiled with an f32 VMEM accumulator.
#   * Row norms are hoisted to glue and passed as (n,1) / (1,n) inputs.
# -----------------------------------------------------------------------------
def _pairwise_kernel(ni_ref, nj_ref, ei_ref, ej_ref, d2_ref, acc_ref):
    k = pl.program_id(2)

    @pl.when(k == 0)
    def _():
        acc_ref[...] = jnp.zeros_like(acc_ref)

    # Feed embeddings in their native dtype (bf16 stays bf16); accumulate in f32.
    acc_ref[...] += lax.dot_general(
        ei_ref[...], ej_ref[...], (((1,), (1,)), ((), ())),
        preferred_element_type=jnp.float32)

    @pl.when(k == pl.num_programs(2) - 1)
    def _():
        # Clamp: the Gram formulation can dip slightly below zero numerically.
        d2_ref[...] = jnp.maximum(
            ni_ref[...] + nj_ref[...] - 2.0 * acc_ref[...], 0.0)


def _pairwise_sq_distances(e_pad, ni, nj, tile_n, tile_k):
    n_pad, d_pad = e_pad.shape
    grid = (n_pad // tile_n, n_pad // tile_n, d_pad // tile_k)
    return pl.pallas_call(
        _pairwise_kernel,
        out_shape=jax.ShapeDtypeStruct((n_pad, n_pad), jnp.float32),
        grid_spec=pltpu.PrefetchScalarGridSpec(
            num_scalar_prefetch=0,
            grid=grid,
            in_specs=[
                pl.BlockSpec((tile_n, 1), lambda i, j, k: (i, 0)),       # ||e_i||^2
                pl.BlockSpec((1, tile_n), lambda i, j, k: (0, j)),       # ||e_j||^2
                pl.BlockSpec((tile_n, tile_k), lambda i, j, k: (i, k)),  # e_i tile
                pl.BlockSpec((tile_n, tile_k), lambda i, j, k: (j, k)),  # e_j tile
            ],
            out_specs=pl.BlockSpec((tile_n, tile_n), lambda i, j, k: (i, j)),
            scratch_shapes=[pltpu.VMEM((tile_n, tile_n), jnp.float32)]),
        compiler_params=pltpu.CompilerParams(
            dimension_semantics=("parallel", "parallel", "arbitrary")),
    )(ni, nj, e_pad, e_pad)


# -----------------------------------------------------------------------------
# Kernel B: on-chip all-triplet hinge / distance sums.
#   For each anchor a:  positives p (same label, p != a) live on sublanes,
#   negatives n (different label) on lanes; the (NP, NP) block
#   relu(D2[a,p] - D2[a,n] + margin) is masked and summed.  Each anchor tile
#   writes its own partial-sum block (parallel grid axis, no scratch).
# -----------------------------------------------------------------------------
def _hinge_tile_kernel(margin, n_valid, d2_ref, laba_ref, labr_ref, labc_ref,
                       loss_ref, apd_ref, and_ref):
    i = pl.program_id(0)
    d2 = d2_ref[...]                       # (TA, NP) distances of this tile's anchors
    ta, npd = d2.shape
    d2t = d2.T                             # (NP, TA): same data, sublane-oriented
    lab_a = laba_ref[...]                  # (TA, 1)  labels of this tile's anchors
    lab_r = labr_ref[...]                  # (1, NP)  all labels, lane-oriented
    lab_c = labc_ref[...]                  # (NP, 1)  all labels, sublane-oriented
    idx_r = lax.broadcasted_iota(jnp.int32, (1, npd), 1)
    idx_c = lax.broadcasted_iota(jnp.int32, (npd, 1), 0)
    valid_r = idx_r < n_valid
    valid_c = idx_c < n_valid

    loss_acc = jnp.float32(0.0)
    ap_acc = jnp.float32(0.0)
    an_acc = jnp.float32(0.0)
    for a in range(ta):                    # static unroll, ta == ANCHOR_TILE
        a_glob = i * ta + a
        anchor_ok = a_glob < n_valid
        la = lab_a[a:a + 1, :]             # (1, 1)
        # Positive mask along sublanes, negative mask along lanes (built in-VPU).
        pm = jnp.where((lab_c == la) & (idx_c != a_glob) & valid_c & anchor_ok,
                       1.0, 0.0)           # (NP, 1)
        nm = jnp.where((lab_r != la) & valid_r & anchor_ok,
                       1.0, 0.0)           # (1, NP)
        ap_col = d2t[:, a:a + 1]           # (NP, 1)  D2[anchor, p]
        an_row = d2[a:a + 1, :]            # (1, NP)  D2[anchor, n]
        h = jnp.maximum(ap_col - an_row + margin, 0.0)   # (NP, NP)
        loss_acc += jnp.sum(h * pm * nm)
        npos = jnp.sum(pm)
        nneg = jnp.sum(nm)
        # ap mean repeats each D2[a,p] once per negative (and vice versa).
        ap_acc += jnp.sum(ap_col * pm) * nneg
        an_acc += jnp.sum(an_row * nm) * npos

    loss_ref[...] = jnp.broadcast_to(loss_acc, loss_ref.shape)
    apd_ref[...] = jnp.broadcast_to(ap_acc, apd_ref.shape)
    and_ref[...] = jnp.broadcast_to(an_acc, and_ref.shape)


def _hinge_sums(d2, lab_col, lab_row, margin, n_valid, ta):
    # TODO(synk): for very large N (n_pad >> 1k) add a negatives-axis grid tile so the
    # per-anchor (NP, NP) intermediate stays bounded in VMEM.
    n_pad = d2.shape[0]
    num_tiles = n_pad // ta
    kernel = functools.partial(_hinge_tile_kernel, float(margin), int(n_valid))
    part_shape = jax.ShapeDtypeStruct((num_tiles, 8, LANE), jnp.float32)
    part_spec = pl.BlockSpec((1, 8, LANE), lambda i: (i, 0, 0))
    return pl.pallas_call(
        kernel,
        out_shape=(part_shape, part_shape, part_shape),
        grid_spec=pltpu.PrefetchScalarGridSpec(
            num_scalar_prefetch=0,
            grid=(num_tiles,),
            in_specs=[
                pl.BlockSpec((ta, n_pad), lambda i: (i, 0)),   # anchor rows of D2
                pl.BlockSpec((ta, 1), lambda i: (i, 0)),       # anchor labels
                pl.BlockSpec((1, n_pad), lambda i: (0, 0)),    # all labels (lanes)
                pl.BlockSpec((n_pad, 1), lambda i: (0, 0)),    # all labels (sublanes)
            ],
            out_specs=(part_spec, part_spec, part_spec)),
        compiler_params=pltpu.CompilerParams(
            dimension_semantics=("parallel",)),
    )(d2, lab_col, lab_row, lab_col)


# -----------------------------------------------------------------------------
# Host-side glue.
# -----------------------------------------------------------------------------
def _all_triplets(labels):
    """AllTripletSelector (host glue; data-dependent output length).

    All (a, p, n) with label[a] == label[p], a != p, label[n] != label[a],
    in the same lexicographic order as the reference triple loop.
    Only needed for the returned triplet tensor; the loss math is on-chip.
    """
    labels = np.asarray(labels)
    n = int(labels.shape[0])
    if n == 0:
        return np.zeros((0, 3), np.int32)
    same = labels[:, None] == labels[None, :]
    pos = same & ~np.eye(n, dtype=bool)
    valid = pos[:, :, None] & (~same)[:, None, :]
    trips = np.argwhere(valid)
    return np.ascontiguousarray(trips, dtype=np.int32).reshape(-1, 3)


def online_triplet_loss(embeddings, target, margin):
    """Pallas equivalent of OnlineTripletLoss.forward (AllTripletSelector)."""
    triplets = _all_triplets(jax.device_get(target))
    num_triplets = int(triplets.shape[0])
    tri = jnp.asarray(triplets)

    if num_triplets == 0:
        # torch's mean over an empty tensor is NaN; preserve that semantics.
        nan = jnp.float32(jnp.nan)
        return [nan, nan, nan, tri, 0]

    n, d = embeddings.shape

    # --- Kernel A: pairwise squared distances (MXU) --------------------------
    # Per-generation tile heuristic: 512 only when N is large and d moderate
    # (v6e-friendly, still inside v7x's 64 MiB / v5e's 16 MiB scoped budgets).
    if n >= 512 and d <= 1024:
        tile_n = 512
    elif n >= 256:
        tile_n = 256
    else:
        tile_n = 128
    n_pad = _round_up(n, tile_n)
    d_pad = _round_up(d, LANE)
    if d_pad <= 512:
        tile_k = d_pad
    elif d_pad % 512 == 0:
        tile_k = 512
    elif d_pad % 256 == 0:
        tile_k = 256
    else:
        tile_k = 128

    e_pad = jnp.pad(embeddings, ((0, n_pad - n), (0, d_pad - d)))
    sq = jnp.sum(e_pad.astype(jnp.float32) ** 2, axis=1)        # hoisted row norms
    d2 = _pairwise_sq_distances(e_pad, sq[:, None], sq[None, :], tile_n, tile_k)

    # --- Kernel B: on-chip all-triplet hinge / distance sums -----------------
    lab_pad = jnp.pad(jnp.asarray(target).astype(jnp.int32), (0, n_pad - n),
                      constant_values=-1)
    lab_col = lab_pad.reshape(n_pad, 1)
    lab_row = lab_pad.reshape(1, n_pad)
    loss_p, ap_p, an_p = _hinge_sums(d2, lab_col, lab_row, margin, n, ANCHOR_TILE)

    # Tiny cross-tile reduce + 1/T normalization in glue (T is a host int, so no
    # kernel recompiles when the triplet count changes batch to batch).
    inv_t = 1.0 / num_triplets
    loss_mean = jnp.sum(loss_p[:, 0, 0]) * inv_t
    ap_mean = jnp.sum(ap_p[:, 0, 0]) * inv_t
    an_mean = jnp.sum(an_p[:, 0, 0]) * inv_t

    # Match the PyTorch return structure:
    # [losses.mean(), ap_distances.mean(), an_distances.mean(), triplets, len(triplets)]
    return [loss_mean, ap_mean, an_mean, tri, num_triplets]


if __name__ == "__main__":
    key = jax.random.PRNGKey(0)
    N, D = 12, 64
    margin = 1.0

    embeddings = jax.random.normal(key, (N, D), dtype=jnp.float32)
    # Deterministic labels: 3 classes of 4 samples each -> 288 triplets.
    target = jnp.array([0, 0, 0, 1, 1, 1, 2, 2, 2, 0, 1, 2], dtype=jnp.int32)

    loss_mean, ap_mean, an_mean, triplets, n_trip = online_triplet_loss(
        embeddings, target, margin)
    loss_mean = jax.block_until_ready(loss_mean)

    # Pure-JAX reference (mirrors the PyTorch forward on the selected triplets).
    tri = jnp.asarray(triplets)
    ap_ref = jnp.sum((embeddings[tri[:, 0]] - embeddings[tri[:, 1]]) ** 2, axis=1)
    an_ref = jnp.sum((embeddings[tri[:, 0]] - embeddings[tri[:, 2]]) ** 2, axis=1)
    loss_ref = jnp.mean(jnp.maximum(ap_ref - an_ref + margin, 0.0))

    assert n_trip == tri.shape[0] and n_trip == 288
    assert jnp.allclose(loss_mean, loss_ref, rtol=1e-4, atol=1e-3)
    assert jnp.allclose(ap_mean, jnp.mean(ap_ref), rtol=1e-4, atol=1e-3)
    assert jnp.allclose(an_mean, jnp.mean(an_ref), rtol=1e-4, atol=1e-3)

    print("KERNEL_OK")
</pallas_src>

<mosaic_0001>
module attributes {stable_mosaic.version = 11 : i64} {
  func.func @_pairwise_kernel(%arg0: i32, %arg1: i32, %arg2: i32, %arg3: memref<128x1xf32, #tpu.memory_space<vmem>>, %arg4: memref<1x128xf32, #tpu.memory_space<vmem>>, %arg5: memref<128x128xf32, #tpu.memory_space<vmem>>, %arg6: memref<128x128xf32, #tpu.memory_space<vmem>>, %arg7: memref<128x128xf32, #tpu.memory_space<vmem>>, %arg8: memref<128x128xf32, #tpu.memory_space<vmem>>) attributes {dimension_semantics = [#tpu.dimension_semantics<parallel>, #tpu.dimension_semantics<parallel>, #tpu.dimension_semantics<arbitrary>], iteration_bounds = array<i64: 1, 1, 1>, scalar_prefetch = 0 : i64, scratch_operands = 1 : i64, tpu.core_type = #tpu.core_type<tc>, window_params = [{transform_indices = @transform_0, window_bounds = array<i64: 128, 1>}, {transform_indices = @transform_1, window_bounds = array<i64: 1, 128>}, {transform_indices = @transform_2, window_bounds = array<i64: 128, 128>}, {transform_indices = @transform_3, window_bounds = array<i64: 128, 128>}, {transform_indices = @transform_4, window_bounds = array<i64: 128, 128>}]} {
    %c0_i32 = arith.constant 0 : i32
    %0 = arith.cmpi eq, %arg2, %c0_i32 : i32
    %1 = arith.extui %0 : i1 to i32
    %c0_i32_0 = arith.constant 0 : i32
    %2 = arith.cmpi ne, %1, %c0_i32_0 : i32
    scf.if %2 {
      %cst_10 = arith.constant 0.000000e+00 : f32
      %12 = vector.broadcast %cst_10 : f32 to vector<128x128xf32>
      %c0_11 = arith.constant 0 : index
      %c0_12 = arith.constant 0 : index
      %13 = vector.load %arg8[%c0_11, %c0_12] : memref<128x128xf32, #tpu.memory_space<vmem>>, vector<128x128xf32>
      tpu.vector_store %arg8[%c0_11, %c0_12], %12 {strides = array<i32>} : memref<128x128xf32, #tpu.memory_space<vmem>>, vector<128x128xf32>,
    } else {
    }
    %c0 = arith.constant 0 : index
    %c0_1 = arith.constant 0 : index
    %3 = vector.load %arg8[%c0, %c0_1] : memref<128x128xf32, #tpu.memory_space<vmem>>, vector<128x128xf32>
    %c0_2 = arith.constant 0 : index
    %c0_3 = arith.constant 0 : index
    %4 = vector.load %arg5[%c0_2, %c0_3] : memref<128x128xf32, #tpu.memory_space<vmem>>, vector<128x128xf32>
    %c0_4 = arith.constant 0 : index
    %c0_5 = arith.constant 0 : index
    %5 = vector.load %arg6[%c0_4, %c0_5] : memref<128x128xf32, #tpu.memory_space<vmem>>, vector<128x128xf32>
    %cst = arith.constant dense<0.000000e+00> : vector<128x128xf32>
    %6 = tpu.matmul %4, %5, %cst {dimension_numbers = #tpu.dot_dimension_numbers<[1], [1], [0], [0], [0, 0, 1, 0], [], []>} : vector<128x128xf32>, vector<128x128xf32>, vector<128x128xf32> -> vector<128x128xf32>
    %7 = arith.addf %3, %6 : vector<128x128xf32>
    %c0_6 = arith.constant 0 : index
    %c0_7 = arith.constant 0 : index
    %8 = vector.load %arg8[%c0_6, %c0_7] : memref<128x128xf32, #tpu.memory_space<vmem>>, vector<128x128xf32>
    tpu.vector_store %arg8[%c0_6, %c0_7], %7 {strides = array<i32>} : memref<128x128xf32, #tpu.memory_space<vmem>>, vector<128x128xf32>,
    %c0_i32_8 = arith.constant 0 : i32
    %9 = arith.cmpi eq, %arg2, %c0_i32_8 : i32
    %10 = arith.extui %9 : i1 to i32
    %c0_i32_9 = arith.constant 0 : i32
    %11 = arith.cmpi ne, %10, %c0_i32_9 : i32
    scf.if %11 {
      %c0_10 = arith.constant 0 : index
      %c0_11 = arith.constant 0 : index
      %12 = vector.load %arg3[%c0_10, %c0_11] : memref<128x1xf32, #tpu.memory_space<vmem>>, vector<128x1xf32>
      %c0_12 = arith.constant 0 : index
      %c0_13 = arith.constant 0 : index
      %13 = vector.load %arg4[%c0_12, %c0_13] : memref<1x128xf32, #tpu.memory_space<vmem>>, vector<1x128xf32>
      %14 = vector.broadcast %12 : vector<128x1xf32> to vector<128x128xf32>
      %15 = vector.broadcast %13 : vector<1x128xf32> to vector<128x128xf32>
      %16 = arith.addf %14, %15 : vector<128x128xf32>
      %c0_14 = arith.constant 0 : index
      %c0_15 = arith.constant 0 : index
      %17 = vector.load %arg8[%c0_14, %c0_15] : memref<128x128xf32, #tpu.memory_space<vmem>>, vector<128x128xf32>
      %cst_16 = arith.constant 2.000000e+00 : f32
      %18 = vector.broadcast %cst_16 : f32 to vector<128x128xf32>
      %19 = arith.mulf %18, %17 : vector<128x128xf32>
      %20 = arith.subf %16, %19 : vector<128x128xf32>
      %cst_17 = arith.constant 0.000000e+00 : f32
      %21 = vector.broadcast %cst_17 : f32 to vector<128x128xf32>
      %22 = arith.maximumf %20, %21 : vector<128x128xf32>
      %c0_18 = arith.constant 0 : index
      %c0_19 = arith.constant 0 : index
      %23 = vector.load %arg7[%c0_18, %c0_19] : memref<128x128xf32, #tpu.memory_space<vmem>>, vector<128x128xf32>
      tpu.vector_store %arg7[%c0_18, %c0_19], %22 {strides = array<i32>} : memref<128x128xf32, #tpu.memory_space<vmem>>, vector<128x128xf32>,
    } else {
    }
    return
  }
  func.func @transform_0(%arg0: i32, %arg1: i32, %arg2: i32) -> (i32, i32) {
    %c0_i32 = arith.constant 0 : i32
    %c0_i32_0 = arith.constant 0 : i32
    return %arg0, %c0_i32 : i32, i32
  }
  func.func @transform_1(%arg0: i32, %arg1: i32, %arg2: i32) -> (i32, i32) {
    %c0_i32 = arith.constant 0 : i32
    %c0_i32_0 = arith.constant 0 : i32
    return %c0_i32, %arg1 : i32, i32
  }
  func.func @transform_2(%arg0: i32, %arg1: i32, %arg2: i32) -> (i32, i32) {
    %c0_i32 = arith.constant 0 : i32
    return %arg0, %arg2 : i32, i32
  }
  func.func @transform_3(%arg0: i32, %arg1: i32, %arg2: i32) -> (i32, i32) {
    %c0_i32 = arith.constant 0 : i32
    return %arg1, %arg2 : i32, i32
  }
  func.func @transform_4(%arg0: i32, %arg1: i32, %arg2: i32) -> (i32, i32) {
    %c0_i32 = arith.constant 0 : i32
    return %arg0, %arg1 : i32, i32
  }
}

</mosaic_0001>

<llo_original>
// kernel: tpu_custom_call.1
$region0: #{tpu_custom_call.1}
  #allocation0 [shape = 'u32[]', space=smem, size = 0x4, offset = 0x4, fixed_abs, tag = 'smem constant byte address 0x4 - core index']
  #allocation1 [shape = 'u32[72,128]{1,0:T(1,128)}', space=vmem, size = 0x9000, scoped, tag = 'internal scratch']
  #allocation2 [shape = 'f32[128,128]{1,0:T(8,128)}', space=vmem, size = 0x10000, scoped, tag = 'scratch operand']
  %s0 = inlined_call_operand.vmem [shape: f32[128,1], index: 0, kind: input, shape index: {}]
  %s1 = inlined_call_operand.vmem [shape: f32[1,128], index: 1, kind: input, shape index: {}]
  %s2 = inlined_call_operand.vmem [shape: f32[128,128], index: 2, kind: input, shape index: {}]
  %s3 = inlined_call_operand.hbm [shape: f32[128,128], index: 3, kind: input, shape index: {}]
  %s4 = inlined_call_operand.hbm [shape: f32[128,128], index: 4, kind: output, shape index: {}]
  %s5 = sld [smem:[#allocation0]]
  $region38: #{tpu_custom_call.1} parent=0
    _
  %s7 = ssub.s32 1, %s5
  %s8 = scalar_select 0, %s7, %s5
  $region1: #{tpu_custom_call.1} parent=0
    #allocation3 [shape = 'u8[65536]{0}', space=vmem, size = 0x10000, scoped, tag = 'input window, operand 3, single buffered']
    #allocation4 [shape = 's32[1]{0}', space=sflag, size = 0x4, scoped, tag = 'scoped memory for tpu_custom_call.1']
    #allocation5 [shape = 's32[1]{0}', space=sflag, size = 0x4, scoped, tag = 'scoped memory for tpu_custom_call.1']
    #allocation6 [shape = 'u8[65536]{0}', space=vmem, size = 0x10000, scoped, tag = 'output window, operand 0, single buffered']
    %9 = vsyncpa [#allocation4], 0
    %10 = vsyncpa [#allocation5], 0
    // Predicated region
    $region2: #{tpu_custom_call.1} parent=1 // pred_check
      _
    $region3: #{tpu_custom_call.1} parent=1 // pred_check_branch
      %12 = sbr.rel (0) target = $region5
    $region4: #{tpu_custom_call.1} parent=1 // pred_region
      _
    $region5: #{tpu_custom_call.1} parent=1 // pred_fallthru
      _
    // Predicated region
    $region6: #{tpu_custom_call.1} parent=1 // pred_check
      _
    $region7: #{tpu_custom_call.1} parent=1 // pred_check_branch
      %14 = sbr.rel (0) target = $region9
    $region8: #{tpu_custom_call.1} parent=1 // pred_region
      _
    $region9: #{tpu_custom_call.1} parent=1 // pred_fallthru
      _
    // Predicated region
    $region10: #{tpu_custom_call.1} parent=1 // pred_check
      _
    $region11: #{tpu_custom_call.1} parent=1 // pred_check_branch
      %16 = sbr.rel (0) target = $region13
    $region12: #{tpu_custom_call.1} parent=1 // pred_region
      _
    $region13: #{tpu_custom_call.1} parent=1 // pred_fallthru
      _
    // Predicated region
    $region14: #{tpu_custom_call.1} parent=1 // pred_check
      _
    $region15: #{tpu_custom_call.1} parent=1 // pred_check_branch
      %18 = sbr.rel (0) target = $region17
    $region16: #{tpu_custom_call.1} parent=1 // pred_region
      %20 = vsyncadd [#allocation4], 0
      %s21 = sshll.u32 %s3, 4
      %s22 = int_to_ptr.hbm [resolvable:$true] %s21
      %s23 = sshll.u32 [#allocation3], 4
      %s24 = int_to_ptr.vmem [resolvable:$true] %s23
      %29 = dma.hbm_to_vmem [thread:$0]  %s22, 2048, %s24, [#allocation4], 128, 128, 8
    $region17: #{tpu_custom_call.1} parent=1 // pred_fallthru
      _
    // Predicated region
    $region18: #{tpu_custom_call.1} parent=1 // pred_check
      _
    $region19: #{tpu_custom_call.1} parent=1 // pred_check_branch
      %31 = sbr.rel (0) target = $region21
    $region20: #{tpu_custom_call.1} parent=1 // pred_region
      %33 = dma.done [#allocation4], 2048
    $region21: #{tpu_custom_call.1} parent=1 // pred_fallthru
      _
    %p34 = scmp.eq.s32.totalorder 0, 0
    // Predicated region
    $region22: #{tpu_custom_call.1} parent=1 // pred_check
      %p35 = pneg %p34
    $region23: #{tpu_custom_call.1} parent=1 // pred_check_branch
      %37 = sbr.rel (%p35) target = $region25
    $region24: #{tpu_custom_call.1} parent=1 // pred_region
      %38 = vst [vmem:[#allocation2] sm:$0xff] 0.0
      %39 = vst [vmem:[#allocation2 + $0x8] sm:$0xff] 0.0
      %40 = vst [vmem:[#allocation2 + $0x10] sm:$0xff] 0.0
      %41 = vst [vmem:[#allocation2 + $0x18] sm:$0xff] 0.0
      %42 = vst [vmem:[#allocation2 + $0x20] sm:$0xff] 0.0
      %43 = vst [vmem:[#allocation2 + $0x28] sm:$0xff] 0.0
      %44 = vst [vmem:[#allocation2 + $0x30] sm:$0xff] 0.0
      %45 = vst [vmem:[#allocation2 + $0x38] sm:$0xff] 0.0
      %46 = vst [vmem:[#allocation2 + $0x40] sm:$0xff] 0.0
      %47 = vst [vmem:[#allocation2 + $0x48] sm:$0xff] 0.0
      %48 = vst [vmem:[#allocation2 + $0x50] sm:$0xff] 0.0
      %49 = vst [vmem:[#allocation2 + $0x58] sm:$0xff] 0.0
      %50 = vst [vmem:[#allocation2 + $0x60] sm:$0xff] 0.0
      %51 = vst [vmem:[#allocation2 + $0x68] sm:$0xff] 0.0
      %52 = vst [vmem:[#allocation2 + $0x70] sm:$0xff] 0.0
      %53 = vst [vmem:[#allocation2 + $0x78] sm:$0xff] 0.0
    $region25: #{tpu_custom_call.1} parent=1 // pred_fallthru
      _
    %v54 = vld [vmem:[#allocation2] sm:$0xff]
    %v55 = vld [vmem:[#allocation2 + $0x8] sm:$0xff]
    %v56 = vld [vmem:[#allocation2 + $0x10] sm:$0xff]
    %v57 = vld [vmem:[#allocation2 + $0x18] sm:$0xff]
    %v58 = vld [vmem:[#allocation2 + $0x20] sm:$0xff]
    %v59 = vld [vmem:[#allocation2 + $0x28] sm:$0xff]
    %v60 = vld [vmem:[#allocation2 + $0x30] sm:$0xff]
    %v61 = vld [vmem:[#allocation2 + $0x38] sm:$0xff]
    %v62 = vld [vmem:[#allocation2 + $0x40] sm:$0xff]
    %v63 = vld [vmem:[#allocation2 + $0x48] sm:$0xff]
    %v64 = vld [vmem:[#allocation2 + $0x50] sm:$0xff]
    %v65 = vld [vmem:[#allocation2 + $0x58] sm:$0xff]
    %v66 = vld [vmem:[#allocation2 + $0x60] sm:$0xff]
    %v67 = vld [vmem:[#allocation2 + $0x68] sm:$0xff]
    %v68 = vld [vmem:[#allocation2 + $0x70] sm:$0xff]
    %v69 = vld [vmem:[#allocation2 + $0x78] sm:$0xff]
    %v70 = vld [vmem:[%s2] sm:$0xff]
    %v71 = vld [vmem:[%s2 + $0x8] sm:$0xff]
    %v72 = vld [vmem:[%s2 + $0x10] sm:$0xff]
    %v73 = vld [vmem:[%s2 + $0x18] sm:$0xff]
    %v74 = vld [vmem:[%s2 + $0x20] sm:$0xff]
    %v75 = vld [vmem:[%s2 + $0x28] sm:$0xff]
    %v76 = vld [vmem:[%s2 + $0x30] sm:$0xff]
    %v77 = vld [vmem:[%s2 + $0x38] sm:$0xff]
    %v78 = vld [vmem:[%s2 + $0x40] sm:$0xff]
    %v79 = vld [vmem:[%s2 + $0x48] sm:$0xff]
    %v80 = vld [vmem:[%s2 + $0x50] sm:$0xff]
    %v81 = vld [vmem:[%s2 + $0x58] sm:$0xff]
    %v82 = vld [vmem:[%s2 + $0x60] sm:$0xff]
    %v83 = vld [vmem:[%s2 + $0x68] sm:$0xff]
    %v84 = vld [vmem:[%s2 + $0x70] sm:$0xff]
    %v85 = vld [vmem:[%s2 + $0x78] sm:$0xff]
    %v86 = vld [vmem:[#allocation3] sm:$0xff]
    %v87 = vld [vmem:[#allocation3 + $0x8] sm:$0xff]
    %v88 = vld [vmem:[#allocation3 + $0x10] sm:$0xff]
    %v89 = vld [vmem:[#allocation3 + $0x18] sm:$0xff]
    %v90 = vld [vmem:[#allocation3 + $0x20] sm:$0xff]
    %v91 = vld [vmem:[#allocation3 + $0x28] sm:$0xff]
    %v92 = vld [vmem:[#allocation3 + $0x30] sm:$0xff]
    %v93 = vld [vmem:[#allocation3 + $0x38] sm:$0xff]
    %v94 = vld [vmem:[#allocation3 + $0x40] sm:$0xff]
    %v95 = vld [vmem:[#allocation3 + $0x48] sm:$0xff]
    %v96 = vld [vmem:[#allocation3 + $0x50] sm:$0xff]
    %v97 = vld [vmem:[#allocation3 + $0x58] sm:$0xff]
    %v98 = vld [vmem:[#allocation3 + $0x60] sm:$0xff]
    %v99 = vld [vmem:[#allocation3 + $0x68] sm:$0xff]
    %v100 = vld [vmem:[#allocation3 + $0x70] sm:$0xff]
    %v101 = vld [vmem:[#allocation3 + $0x78] sm:$0xff]
    %102 = vmatpush.xpose.msra.mxu0 %v101
    %103 = vmatpush.xpose.msra.mxu0 %v100
    %104 = vmatpush.xpose.msra.mxu0 %v99
    %105 = vmatpush.xpose.msra.mxu0 %v98
    %106 = vmatpush.xpose.msra.mxu0 %v97
    %107 = vmatpush.xpose.msra.mxu0 %v96
    %108 = vmatpush.xpose.msra.mxu0 %v95
    %109 = vmatpush.xpose.msra.mxu0 %v94
    %110 = vmatpush.xpose.msra.mxu0 %v93
    %111 = vmatpush.xpose.msra.mxu0 %v92
    %112 = vmatpush.xpose.msra.mxu0 %v91
    %113 = vmatpush.xpose.msra.mxu0 %v90
    %114 = vmatpush.xpose.msra.mxu0 %v89
    %115 = vmatpush.xpose.msra.mxu0 %v88
    %116 = vmatpush.xpose.msra.mxu0 %v87
    %117 = vmatpush.xpose.msra.mxu0 %v86
    %118 = vmatmul.f32.gmra.mxu0 %v70
    %v119 = vpop.f32.mrf.mxu0
    %v120 = vadd.f32 0.0, %v119
    %121 = vmatmul.f32.gmra.mxu0 %v71
    %v122 = vpop.f32.mrf.mxu0
    %v123 = vadd.f32 0.0, %v122
    %124 = vmatmul.f32.gmra.mxu0 %v72
    %v125 = vpop.f32.mrf.mxu0
    %v126 = vadd.f32 0.0, %v125
    %127 = vmatmul.f32.gmra.mxu0 %v73
    %v128 = vpop.f32.mrf.mxu0
    %v129 = vadd.f32 0.0, %v128
    %130 = vmatmul.f32.gmra.mxu0 %v74
    %v131 = vpop.f32.mrf.mxu0
    %v132 = vadd.f32 0.0, %v131
    %133 = vmatmul.f32.gmra.mxu0 %v75
    %v134 = vpop.f32.mrf.mxu0
    %v135 = vadd.f32 0.0, %v134
    %136 = vmatmul.f32.gmra.mxu0 %v76
    %v137 = vpop.f32.mrf.mxu0
    %v138 = vadd.f32 0.0, %v137
    %139 = vmatmul.f32.gmra.mxu0 %v77
    %v140 = vpop.f32.mrf.mxu0
    %v141 = vadd.f32 0.0, %v140
    %142 = vmatmul.f32.gmra.mxu0 %v78
    %v143 = vpop.f32.mrf.mxu0
    %v144 = vadd.f32 0.0, %v143
    %145 = vmatmul.f32.gmra.mxu0 %v79
    %v146 = vpop.f32.mrf.mxu0
    %v147 = vadd.f32 0.0, %v146
    %148 = vmatmul.f32.gmra.mxu0 %v80
    %v149 = vpop.f32.mrf.mxu0
    %v150 = vadd.f32 0.0, %v149
    %151 = vmatmul.f32.gmra.mxu0 %v81
    %v152 = vpop.f32.mrf.mxu0
    %v153 = vadd.f32 0.0, %v152
    %154 = vmatmul.f32.gmra.mxu0 %v82
    %v155 = vpop.f32.mrf.mxu0
    %v156 = vadd.f32 0.0, %v155
    %157 = vmatmul.f32.gmra.mxu0 %v83
    %v158 = vpop.f32.mrf.mxu0
    %v159 = vadd.f32 0.0, %v158
    %160 = vmatmul.f32.gmra.mxu0 %v84
    %v161 = vpop.f32.mrf.mxu0
    %v162 = vadd.f32 0.0, %v161
    %163 = vmatmul.f32.gmra.mxu0 %v85
    %v164 = vpop.f32.mrf.mxu0
    %v165 = vadd.f32 0.0, %v164
    %166 = vdwg.mxu0
    %v167 = vadd.f32 %v54, %v120
    %v168 = vadd.f32 %v55, %v123
    %v169 = vadd.f32 %v56, %v126
    %v170 = vadd.f32 %v57, %v129
    %v171 = vadd.f32 %v58, %v132
    %v172 = vadd.f32 %v59, %v135
    %v173 = vadd.f32 %v60, %v138
    %v174 = vadd.f32 %v61, %v141
    %v175 = vadd.f32 %v62, %v144
    %v176 = vadd.f32 %v63, %v147
    %v177 = vadd.f32 %v64, %v150
    %v178 = vadd.f32 %v65, %v153
    %v179 = vadd.f32 %v66, %v156
    %v180 = vadd.f32 %v67, %v159
    %v181 = vadd.f32 %v68, %v162
    %v182 = vadd.f32 %v69, %v165
    %183 = vst [vmem:[#allocation2] sm:$0xff] %v167
    %184 = vst [vmem:[#allocation2 + $0x8] sm:$0xff] %v168
    %185 = vst [vmem:[#allocation2 + $0x10] sm:$0xff] %v169
    %186 = vst [vmem:[#allocation2 + $0x18] sm:$0xff] %v170
    %187 = vst [vmem:[#allocation2 + $0x20] sm:$0xff] %v171
    %188 = vst [vmem:[#allocation2 + $0x28] sm:$0xff] %v172
    %189 = vst [vmem:[#allocation2 + $0x30] sm:$0xff] %v173
    %190 = vst [vmem:[#allocation2 + $0x38] sm:$0xff] %v174
    %191 = vst [vmem:[#allocation2 + $0x40] sm:$0xff] %v175
    %192 = vst [vmem:[#allocation2 + $0x48] sm:$0xff] %v176
    %193 = vst [vmem:[#allocation2 + $0x50] sm:$0xff] %v177
    %194 = vst [vmem:[#allocation2 + $0x58] sm:$0xff] %v178
    %195 = vst [vmem:[#allocation2 + $0x60] sm:$0xff] %v179
    %196 = vst [vmem:[#allocation2 + $0x68] sm:$0xff] %v180
    %197 = vst [vmem:[#allocation2 + $0x70] sm:$0xff] %v181
    %198 = vst [vmem:[#allocation2 + $0x78] sm:$0xff] %v182
    // Predicated region
    $region26: #{tpu_custom_call.1} parent=1 // pred_check
      %p199 = pneg %p34
    $region27: #{tpu_custom_call.1} parent=1 // pred_check_branch
      %201 = sbr.rel (%p199) target = $region29
    $region28: #{tpu_custom_call.1} parent=1 // pred_region
      %v202 = vld [vmem:[%s0] sm:$0xff]
      %v203 = vld [vmem:[%s0 + $0x8] sm:$0xff]
      %v204 = vld [vmem:[%s0 + $0x10] sm:$0xff]
      %v205 = vld [vmem:[%s0 + $0x18] sm:$0xff]
      %v206 = vld [vmem:[%s0 + $0x20] sm:$0xff]
      %v207 = vld [vmem:[%s0 + $0x28] sm:$0xff]
      %v208 = vld [vmem:[%s0 + $0x30] sm:$0xff]
      %v209 = vld [vmem:[%s0 + $0x38] sm:$0xff]
      %v210 = vld [vmem:[%s0 + $0x40] sm:$0xff]
      %v211 = vld [vmem:[%s0 + $0x48] sm:$0xff]
      %v212 = vld [vmem:[%s0 + $0x50] sm:$0xff]
      %v213 = vld [vmem:[%s0 + $0x58] sm:$0xff]
      %v214 = vld [vmem:[%s0 + $0x60] sm:$0xff]
      %v215 = vld [vmem:[%s0 + $0x68] sm:$0xff]
      %v216 = vld [vmem:[%s0 + $0x70] sm:$0xff]
      %v217 = vld [vmem:[%s0 + $0x78] sm:$0xff]
      %v218 = vld [vmem:[%s1] sm:$0x1]
      %220 = vset.pattern.permute.xlu0 0
      %221 = vperm.xlu0 %220, %v202
      %v222 = vpop.permute.xlu0 %221
      %225 = vset.pattern.permute.xlu0 0
      %226 = vperm.xlu0 %225, %v203
      %v227 = vpop.permute.xlu0 %226
      %230 = vset.pattern.permute.xlu0 0
      %231 = vperm.xlu0 %230, %v204
      %v232 = vpop.permute.xlu0 %231
      %235 = vset.pattern.permute.xlu0 0
      %236 = vperm.xlu0 %235, %v205
      %v237 = vpop.permute.xlu0 %236
      %240 = vset.pattern.permute.xlu0 0
      %241 = vperm.xlu0 %240, %v206
      %v242 = vpop.permute.xlu0 %241
      %245 = vset.pattern.permute.xlu0 0
      %246 = vperm.xlu0 %245, %v207
      %v247 = vpop.permute.xlu0 %246
      %250 = vset.pattern.permute.xlu0 0
      %251 = vperm.xlu0 %250, %v208
      %v252 = vpop.permute.xlu0 %251
      %255 = vset.pattern.permute.xlu0 0
      %256 = vperm.xlu0 %255, %v209
      %v257 = vpop.permute.xlu0 %256
      %260 = vset.pattern.permute.xlu0 0
      %261 = vperm.xlu0 %260, %v210
      %v262 = vpop.permute.xlu0 %261
      %265 = vset.pattern.permute.xlu0 0
      %266 = vperm.xlu0 %265, %v211
      %v267 = vpop.permute.xlu0 %266
      %270 = vset.pattern.permute.xlu0 0
      %271 = vperm.xlu0 %270, %v212
      %v272 = vpop.permute.xlu0 %271
      %275 = vset.pattern.permute.xlu0 0
      %276 = vperm.xlu0 %275, %v213
      %v277 = vpop.permute.xlu0 %276
      %280 = vset.pattern.permute.xlu0 0
      %281 = vperm.xlu0 %280, %v214
      %v282 = vpop.permute.xlu0 %281
      %285 = vset.pattern.permute.xlu0 0
      %286 = vperm.xlu0 %285, %v215
      %v287 = vpop.permute.xlu0 %286
      %290 = vset.pattern.permute.xlu0 0
      %291 = vperm.xlu0 %290, %v216
      %v292 = vpop.permute.xlu0 %291
      %295 = vset.pattern.permute.xlu0 0
      %296 = vperm.xlu0 %295, %v217
      %v297 = vpop.permute.xlu0 %296
      %v300 = vperm.slane %v218, 0
      %v302 = vadd.f32 %v222, %v300
      %v303 = vadd.f32 %v227, %v300
      %v304 = vadd.f32 %v232, %v300
      %v305 = vadd.f32 %v237, %v300
      %v306 = vadd.f32 %v242, %v300
      %v307 = vadd.f32 %v247, %v300
      %v308 = vadd.f32 %v252, %v300
      %v309 = vadd.f32 %v257, %v300
      %v310 = vadd.f32 %v262, %v300
      %v311 = vadd.f32 %v267, %v300
      %v312 = vadd.f32 %v272, %v300
      %v313 = vadd.f32 %v277, %v300
      %v314 = vadd.f32 %v282, %v300
      %v315 = vadd.f32 %v287, %v300
      %v316 = vadd.f32 %v292, %v300
      %v317 = vadd.f32 %v297, %v300
      %v318 = vld [vmem:[#allocation2] sm:$0xff]
      %v319 = vld [vmem:[#allocation2 + $0x8] sm:$0xff]
      %v320 = vld [vmem:[#allocation2 + $0x10] sm:$0xff]
      %v321 = vld [vmem:[#allocation2 + $0x18] sm:$0xff]
      %v322 = vld [vmem:[#allocation2 + $0x20] sm:$0xff]
      %v323 = vld [vmem:[#allocation2 + $0x28] sm:$0xff]
      %v324 = vld [vmem:[#allocation2 + $0x30] sm:$0xff]
      %v325 = vld [vmem:[#allocation2 + $0x38] sm:$0xff]
      %v326 = vld [vmem:[#allocation2 + $0x40] sm:$0xff]
      %v327 = vld [vmem:[#allocation2 + $0x48] sm:$0xff]
      %v328 = vld [vmem:[#allocation2 + $0x50] sm:$0xff]
      %v329 = vld [vmem:[#allocation2 + $0x58] sm:$0xff]
      %v330 = vld [vmem:[#allocation2 + $0x60] sm:$0xff]
      %v331 = vld [vmem:[#allocation2 + $0x68] sm:$0xff]
      %v332 = vld [vmem:[#allocation2 + $0x70] sm:$0xff]
      %v333 = vld [vmem:[#allocation2 + $0x78] sm:$0xff]
      %v334 = vmul.f32 %v318, 2.0
      %v335 = vmul.f32 %v319, 2.0
      %v336 = vmul.f32 %v320, 2.0
      %v337 = vmul.f32 %v321, 2.0
      %v338 = vmul.f32 %v322, 2.0
      %v339 = vmul.f32 %v323, 2.0
      %v340 = vmul.f32 %v324, 2.0
      %v341 = vmul.f32 %v325, 2.0
      %v342 = vmul.f32 %v326, 2.0
      %v343 = vmul.f32 %v327, 2.0
      %v344 = vmul.f32 %v328, 2.0
      %v345 = vmul.f32 %v329, 2.0
      %v346 = vmul.f32 %v330, 2.0
      %v347 = vmul.f32 %v331, 2.0
      %v348 = vmul.f32 %v332, 2.0
      %v349 = vmul.f32 %v333, 2.0
      %v350 = vsub.f32 %v302, %v334
      %v351 = vsub.f32 %v303, %v335
      %v352 = vsub.f32 %v304, %v336
      %v353 = vsub.f32 %v305, %v337
      %v354 = vsub.f32 %v306, %v338
      %v355 = vsub.f32 %v307, %v339
      %v356 = vsub.f32 %v308, %v340
      %v357 = vsub.f32 %v309, %v341
      %v358 = vsub.f32 %v310, %v342
      %v359 = vsub.f32 %v311, %v343
      %v360 = vsub.f32 %v312, %v344
      %v361 = vsub.f32 %v313, %v345
      %v362 = vsub.f32 %v314, %v346
      %v363 = vsub.f32 %v315, %v347
      %v364 = vsub.f32 %v316, %v348
      %v365 = vsub.f32 %v317, %v349
      %v366 = vmax.f32 %v350, 0.0
      %v367 = vmax.f32 %v351, 0.0
      %v368 = vmax.f32 %v352, 0.0
      %v369 = vmax.f32 %v353, 0.0
      %v370 = vmax.f32 %v354, 0.0
      %v371 = vmax.f32 %v355, 0.0
      %v372 = vmax.f32 %v356, 0.0
      %v373 = vmax.f32 %v357, 0.0
      %v374 = vmax.f32 %v358, 0.0
      %v375 = vmax.f32 %v359, 0.0
      %v376 = vmax.f32 %v360, 0.0
      %v377 = vmax.f32 %v361, 0.0
      %v378 = vmax.f32 %v362, 0.0
      %v379 = vmax.f32 %v363, 0.0
      %v380 = vmax.f32 %v364, 0.0
      %v381 = vmax.f32 %v365, 0.0
      %382 = vst [vmem:[#allocation6] sm:$0xff] %v366
      %383 = vst [vmem:[#allocation6 + $0x8] sm:$0xff] %v367
      %384 = vst [vmem:[#allocation6 + $0x10] sm:$0xff] %v368
      %385 = vst [vmem:[#allocation6 + $0x18] sm:$0xff] %v369
      %386 = vst [vmem:[#allocation6 + $0x20] sm:$0xff] %v370
      %387 = vst [vmem:[#allocation6 + $0x28] sm:$0xff] %v371
      %388 = vst [vmem:[#allocation6 + $0x30] sm:$0xff] %v372
      %389 = vst [vmem:[#allocation6 + $0x38] sm:$0xff] %v373
      %390 = vst [vmem:[#allocation6 + $0x40] sm:$0xff] %v374
      %391 = vst [vmem:[#allocation6 + $0x48] sm:$0xff] %v375
      %392 = vst [vmem:[#allocation6 + $0x50] sm:$0xff] %v376
      %393 = vst [vmem:[#allocation6 + $0x58] sm:$0xff] %v377
      %394 = vst [vmem:[#allocation6 + $0x60] sm:$0xff] %v378
      %395 = vst [vmem:[#allocation6 + $0x68] sm:$0xff] %v379
      %396 = vst [vmem:[#allocation6 + $0x70] sm:$0xff] %v380
      %397 = vst [vmem:[#allocation6 + $0x78] sm:$0xff] %v381
    $region29: #{tpu_custom_call.1} parent=1 // pred_fallthru
      _
    // Predicated region
    $region30: #{tpu_custom_call.1} parent=1 // pred_check
      _
    $region31: #{tpu_custom_call.1} parent=1 // pred_check_branch
      %399 = sbr.rel (0) target = $region33
    $region32: #{tpu_custom_call.1} parent=1 // pred_region
      %401 = vsyncadd [#allocation5], 0
      %s402 = sshll.u32 [#allocation6], 4
      %s403 = int_to_ptr.vmem [resolvable:$true] %s402
      %s404 = sshll.u32 %s4, 4
      %s405 = int_to_ptr.hbm [resolvable:$true] %s404
      %410 = dma.vmem_to_hbm [thread:$0]  %s403, 2048, %s405, [#allocation5], 128, 128, 8
    $region33: #{tpu_custom_call.1} parent=1 // pred_fallthru
      _
    // Predicated region
    $region34: #{tpu_custom_call.1} parent=1 // pred_check
      _
    $region35: #{tpu_custom_call.1} parent=1 // pred_check_branch
      %412 = sbr.rel (0) target = $region37
    $region36: #{tpu_custom_call.1} parent=1 // pred_region
      %414 = dma.done [#allocation5], 2048
    $region37: #{tpu_custom_call.1} parent=1 // pred_fallthru
      _
    %415 = vsyncpa [#allocation4], 1
    %416 = vsyncpa [#allocation5], 1

</llo_original>
